<compile_context>
chip_gen: v5e
topology: v5e:2x2
jax: 0.10.0
libtpu: 0.0.40
codegen_flags: <defaults>
</compile_context>

<pallas_src>
import jax
import jax.numpy as jnp
from jax.experimental import pallas as pl
from jax.experimental.pallas import tpu as pltpu


def _round_up(x, m):
    return ((x + m - 1) // m) * m


def _head_kernel(lw_ref, feats_ref, dw_ref, db_ref, ow_ref, ob_ref, o_ref):
    # lw_ref:    SMEM (L_sel,)        normalized layer weights (already divided by their sum)
    # feats_ref: VMEM (L_sel, Bt, H)  CLS-token hidden states for this batch tile (native dtype)
    # dw_ref:    VMEM (H, H)          dense weight, (in, out) layout
    # db_ref:    VMEM (1, H)          dense bias (f32)
    # ow_ref:    VMEM (H, Cp)         out_proj weight, (in, out) layout, lane-padded to Cp
    # ob_ref:    VMEM (1, Cp)         out_proj bias, lane-padded (f32)
    # o_ref:     VMEM (Bt, Cp)        logits slab (lane-dense store; sliced to C in the wrapper)
    L_sel = feats_ref.shape[0]

    # WeightedLayerPooling on CLS rows only: unrolled scalar-multiply-adds, f32 accumulate.
    acc = lw_ref[0] * feats_ref[0].astype(jnp.float32)
    for l in range(1, L_sel):
        acc = acc + lw_ref[l] * feats_ref[l].astype(jnp.float32)

    # TODO(synk): dropout is identity (eval mode); training-mode dropout not implemented.

    # dense -> tanh (MXU, f32 accumulate).
    h = jnp.dot(acc, dw_ref[...], preferred_element_type=jnp.float32) + db_ref[...]
    h = jnp.tanh(h)

    # out_proj into a lane-dense (Bt, Cp) slab.
    o_ref[...] = (jnp.dot(h, ow_ref[...], preferred_element_type=jnp.float32)
                  + ob_ref[...]).astype(o_ref.dtype)


def roberta_classification_head(features, layer_weights, dense_w, dense_b,
                                out_w, out_b, *, layer_start=9):
    """features: (L+1, B, S, H) stacked hidden states (layer-major, like torch.stack).
       layer_weights: (L+1-layer_start,)
       dense_w: (H, H) stored (in, out);  dense_b: (H,)
       out_w:   (H, C) stored (in, out);  out_b:   (C,)
       Returns (B, C) f32 logits."""
    # Glue: keep only the selected layers and the CLS (seq position 0) row.
    feats_cls = features[layer_start:, :, 0, :]          # (L_sel, B, H)
    L_sel, B, H = feats_cls.shape
    C = out_w.shape[1]

    # Batch tiling (parallel grid); weights/biases stay whole and VMEM-resident.
    B_tile = min(128, _round_up(B, 8))
    Bp = _round_up(B, B_tile)
    Cp = _round_up(C, 128)                               # lane-dense output width

    if Bp != B:
        feats_cls = jnp.pad(feats_cls, ((0, 0), (0, Bp - B), (0, 0)))
    ow_pad = jnp.pad(out_w, ((0, 0), (0, Cp - C)))
    ob_pad = jnp.pad(out_b, ((0, Cp - C),)).reshape(1, Cp).astype(jnp.float32)
    db2d = dense_b.reshape(1, H).astype(jnp.float32)

    # Pre-normalize the layer weights (== dividing the weighted sum by sum(w)).
    lw_norm = (layer_weights / jnp.sum(layer_weights)).astype(jnp.float32)

    grid = (Bp // B_tile,)
    out = pl.pallas_call(
        _head_kernel,
        out_shape=jax.ShapeDtypeStruct((Bp, Cp), jnp.float32),
        grid_spec=pltpu.PrefetchScalarGridSpec(
            num_scalar_prefetch=1,                       # lw_norm -> SMEM
            grid=grid,
            in_specs=[
                # CLS features: tiled over batch.
                pl.BlockSpec((L_sel, B_tile, H), lambda b, lw: (0, b, 0)),
                # Weights / biases: constant index_map -> resident across grid steps.
                pl.BlockSpec((H, H), lambda b, lw: (0, 0)),
                pl.BlockSpec((1, H), lambda b, lw: (0, 0)),
                pl.BlockSpec((H, Cp), lambda b, lw: (0, 0)),
                pl.BlockSpec((1, Cp), lambda b, lw: (0, 0)),
            ],
            out_specs=pl.BlockSpec((B_tile, Cp), lambda b, lw: (b, 0)),
        ),
        compiler_params=pltpu.CompilerParams(
            dimension_semantics=("parallel",),
            vmem_limit_bytes=32 * 1024 * 1024,
        ),
    )(lw_norm, feats_cls, dense_w, db2d, ow_pad, ob_pad)

    return out[:B, :C]


def _reference(features, layer_weights, dense_w, dense_b, out_w, out_b, layer_start=9):
    sel = features[layer_start:]
    w = layer_weights[:, None, None, None]
    pooled = (w * sel).sum(0) / layer_weights.sum()
    x = pooled[:, 0]
    h = jnp.tanh(x @ dense_w + dense_b)
    return h @ out_w + out_b


if __name__ == "__main__":
    # Small config: num_hidden_layers=12, hidden_size=32, seq=8, batch=2, num_labels=4.
    num_hidden_layers = 12
    layer_start = 9
    B, S, H, C = 2, 8, 32, 4
    L_total = num_hidden_layers + 1        # 13 stacked hidden states
    L_sel = L_total - layer_start          # 4

    key = jax.random.PRNGKey(0)
    k_feat, k_dw, k_db, k_ow, k_ob = jax.random.split(key, 5)

    features = jax.random.normal(k_feat, (L_total, B, S, H), dtype=jnp.float32)
    layer_weights = jnp.ones((L_sel,), dtype=jnp.float32)          # nn.Parameter init = all ones
    dense_w = 0.02 * jax.random.normal(k_dw, (H, H), dtype=jnp.float32)   # stored (in, out)
    dense_b = 0.02 * jax.random.normal(k_db, (H,), dtype=jnp.float32)
    out_w = 0.02 * jax.random.normal(k_ow, (H, C), dtype=jnp.float32)     # stored (in, out)
    out_b = 0.02 * jax.random.normal(k_ob, (C,), dtype=jnp.float32)

    out = roberta_classification_head(features, layer_weights, dense_w, dense_b,
                                      out_w, out_b, layer_start=layer_start)
    out = jax.block_until_ready(out)

    ref = _reference(features, layer_weights, dense_w, dense_b, out_w, out_b, layer_start)
    assert out.shape == (B, C)
    assert jnp.allclose(out, ref, atol=1e-5, rtol=1e-5)
    print("KERNEL_OK")
</pallas_src>

<mosaic_0001>
module attributes {stable_mosaic.version = 11 : i64} {
  func.func @_head_kernel(%arg0: i32, %arg1: memref<4xf32, #tpu.memory_space<smem>>, %arg2: memref<4x8x32xf32, #tpu.memory_space<vmem>>, %arg3: memref<32x32xf32, #tpu.memory_space<vmem>>, %arg4: memref<1x32xf32, #tpu.memory_space<vmem>>, %arg5: memref<32x128xf32, #tpu.memory_space<vmem>>, %arg6: memref<1x128xf32, #tpu.memory_space<vmem>>, %arg7: memref<8x128xf32, #tpu.memory_space<vmem>>) attributes {dimension_semantics = [#tpu.dimension_semantics<parallel>], iteration_bounds = array<i64: 1>, scalar_prefetch = 1 : i64, scratch_operands = 0 : i64, tpu.core_type = #tpu.core_type<tc>, window_params = [{transform_indices = @transform_0, window_bounds = array<i64: 4, 8, 32>}, {pipeline_mode = #tpu.pipeline_mode<synchronous>, transform_indices = @transform_1, window_bounds = array<i64: 32, 32>}, {pipeline_mode = #tpu.pipeline_mode<synchronous>, transform_indices = @transform_2, window_bounds = array<i64: 1, 32>}, {pipeline_mode = #tpu.pipeline_mode<synchronous>, transform_indices = @transform_3, window_bounds = array<i64: 32, 128>}, {pipeline_mode = #tpu.pipeline_mode<synchronous>, transform_indices = @transform_4, window_bounds = array<i64: 1, 128>}, {transform_indices = @transform_5, window_bounds = array<i64: 8, 128>}]} {
    %c0 = arith.constant 0 : index
    %0 = memref.load %arg1[%c0] : memref<4xf32, #tpu.memory_space<smem>>
    %c0_0 = arith.constant 0 : index
    %c0_1 = arith.constant 0 : index
    %c0_2 = arith.constant 0 : index
    %1 = vector.load %arg2[%c0_0, %c0_1, %c0_2] : memref<4x8x32xf32, #tpu.memory_space<vmem>>, vector<1x8x32xf32>
    %2 = vector.shape_cast %1 : vector<1x8x32xf32> to vector<8x32xf32>
    %3 = vector.broadcast %0 : f32 to vector<8x32xf32>
    %4 = arith.mulf %3, %2 : vector<8x32xf32>
    %c1 = arith.constant 1 : index
    %5 = memref.load %arg1[%c1] : memref<4xf32, #tpu.memory_space<smem>>
    %c1_3 = arith.constant 1 : index
    %c0_4 = arith.constant 0 : index
    %c0_5 = arith.constant 0 : index
    %6 = vector.load %arg2[%c1_3, %c0_4, %c0_5] : memref<4x8x32xf32, #tpu.memory_space<vmem>>, vector<1x8x32xf32>
    %7 = vector.shape_cast %6 : vector<1x8x32xf32> to vector<8x32xf32>
    %8 = vector.broadcast %5 : f32 to vector<8x32xf32>
    %9 = arith.mulf %8, %7 : vector<8x32xf32>
    %10 = arith.addf %4, %9 : vector<8x32xf32>
    %c2 = arith.constant 2 : index
    %11 = memref.load %arg1[%c2] : memref<4xf32, #tpu.memory_space<smem>>
    %c2_6 = arith.constant 2 : index
    %c0_7 = arith.constant 0 : index
    %c0_8 = arith.constant 0 : index
    %12 = vector.load %arg2[%c2_6, %c0_7, %c0_8] : memref<4x8x32xf32, #tpu.memory_space<vmem>>, vector<1x8x32xf32>
    %13 = vector.shape_cast %12 : vector<1x8x32xf32> to vector<8x32xf32>
    %14 = vector.broadcast %11 : f32 to vector<8x32xf32>
    %15 = arith.mulf %14, %13 : vector<8x32xf32>
    %16 = arith.addf %10, %15 : vector<8x32xf32>
    %c3 = arith.constant 3 : index
    %17 = memref.load %arg1[%c3] : memref<4xf32, #tpu.memory_space<smem>>
    %c3_9 = arith.constant 3 : index
    %c0_10 = arith.constant 0 : index
    %c0_11 = arith.constant 0 : index
    %18 = vector.load %arg2[%c3_9, %c0_10, %c0_11] : memref<4x8x32xf32, #tpu.memory_space<vmem>>, vector<1x8x32xf32>
    %19 = vector.shape_cast %18 : vector<1x8x32xf32> to vector<8x32xf32>
    %20 = vector.broadcast %17 : f32 to vector<8x32xf32>
    %21 = arith.mulf %20, %19 : vector<8x32xf32>
    %22 = arith.addf %16, %21 : vector<8x32xf32>
    %c0_12 = arith.constant 0 : index
    %c0_13 = arith.constant 0 : index
    %23 = vector.load %arg3[%c0_12, %c0_13] : memref<32x32xf32, #tpu.memory_space<vmem>>, vector<32x32xf32>
    %cst = arith.constant dense<0.000000e+00> : vector<8x32xf32>
    %24 = tpu.matmul %22, %23, %cst {dimension_numbers = #tpu.dot_dimension_numbers<[1], [0], [0], [1], [0, 0, 1, 1], [], []>} : vector<8x32xf32>, vector<32x32xf32>, vector<8x32xf32> -> vector<8x32xf32>
    %c0_14 = arith.constant 0 : index
    %c0_15 = arith.constant 0 : index
    %25 = vector.load %arg4[%c0_14, %c0_15] : memref<1x32xf32, #tpu.memory_space<vmem>>, vector<1x32xf32>
    %26 = vector.broadcast %25 : vector<1x32xf32> to vector<8x32xf32>
    %27 = arith.addf %24, %26 : vector<8x32xf32>
    %28 = math.tanh %27 : vector<8x32xf32>
    %c0_16 = arith.constant 0 : index
    %c0_17 = arith.constant 0 : index
    %29 = vector.load %arg5[%c0_16, %c0_17] : memref<32x128xf32, #tpu.memory_space<vmem>>, vector<32x128xf32>
    %cst_18 = arith.constant dense<0.000000e+00> : vector<8x128xf32>
    %30 = tpu.matmul %28, %29, %cst_18 {dimension_numbers = #tpu.dot_dimension_numbers<[1], [0], [0], [1], [0, 0, 1, 1], [], []>} : vector<8x32xf32>, vector<32x128xf32>, vector<8x128xf32> -> vector<8x128xf32>
    %c0_19 = arith.constant 0 : index
    %c0_20 = arith.constant 0 : index
    %31 = vector.load %arg6[%c0_19, %c0_20] : memref<1x128xf32, #tpu.memory_space<vmem>>, vector<1x128xf32>
    %32 = vector.broadcast %31 : vector<1x128xf32> to vector<8x128xf32>
    %33 = arith.addf %30, %32 : vector<8x128xf32>
    %c0_21 = arith.constant 0 : index
    %c0_22 = arith.constant 0 : index
    %34 = vector.load %arg7[%c0_21, %c0_22] : memref<8x128xf32, #tpu.memory_space<vmem>>, vector<8x128xf32>
    tpu.vector_store %arg7[%c0_21, %c0_22], %33 {strides = array<i32>} : memref<8x128xf32, #tpu.memory_space<vmem>>, vector<8x128xf32>,
    return
  }
  func.func @transform_0(%arg0: i32, %arg1: memref<4xf32, #tpu.memory_space<smem>>) -> (i32, i32, i32) {
    %c0_i32 = arith.constant 0 : i32
    %c0_i32_0 = arith.constant 0 : i32
    %c0_i32_1 = arith.constant 0 : i32
    return %c0_i32, %arg0, %c0_i32_0 : i32, i32, i32
  }
  func.func @transform_1(%arg0: i32, %arg1: memref<4xf32, #tpu.memory_space<smem>>) -> (i32, i32) {
    %c0_i32 = arith.constant 0 : i32
    %c0_i32_0 = arith.constant 0 : i32
    %c0_i32_1 = arith.constant 0 : i32
    return %c0_i32, %c0_i32_0 : i32, i32
  }
  func.func @transform_2(%arg0: i32, %arg1: memref<4xf32, #tpu.memory_space<smem>>) -> (i32, i32) {
    %c0_i32 = arith.constant 0 : i32
    %c0_i32_0 = arith.constant 0 : i32
    %c0_i32_1 = arith.constant 0 : i32
    return %c0_i32, %c0_i32_0 : i32, i32
  }
  func.func @transform_3(%arg0: i32, %arg1: memref<4xf32, #tpu.memory_space<smem>>) -> (i32, i32) {
    %c0_i32 = arith.constant 0 : i32
    %c0_i32_0 = arith.constant 0 : i32
    %c0_i32_1 = arith.constant 0 : i32
    return %c0_i32, %c0_i32_0 : i32, i32
  }
  func.func @transform_4(%arg0: i32, %arg1: memref<4xf32, #tpu.memory_space<smem>>) -> (i32, i32) {
    %c0_i32 = arith.constant 0 : i32
    %c0_i32_0 = arith.constant 0 : i32
    %c0_i32_1 = arith.constant 0 : i32
    return %c0_i32, %c0_i32_0 : i32, i32
  }
  func.func @transform_5(%arg0: i32, %arg1: memref<4xf32, #tpu.memory_space<smem>>) -> (i32, i32) {
    %c0_i32 = arith.constant 0 : i32
    %c0_i32_0 = arith.constant 0 : i32
    return %arg0, %c0_i32 : i32, i32
  }
}

</mosaic_0001>

<llo_original>
// kernel: tpu_custom_call.1
$region0: #{tpu_custom_call.1}
  #allocation0 [shape = 'u32[]', space=smem, size = 0x4, offset = 0x4, fixed_abs, tag = 'smem constant byte address 0x4 - core index']
  #allocation1 [shape = 'u32[72,128]{1,0:T(1,128)}', space=vmem, size = 0x9000, scoped, tag = 'internal scratch']
  #allocation2 [shape = 's32[1]{0}', space=sflag, size = 0x4, scoped, tag = 'scoped memory for tpu_custom_call.1']
  #allocation3 [shape = 'u8[512]{0}', space=smem, size = 0x200, scoped, tag = 'prefetched SMEM operand 0']
  %s0 = inlined_call_operand.hbm [shape: f32[4], index: 0, kind: input, shape index: {}]
  %s1 = inlined_call_operand.hbm [shape: f32[4,8,32], index: 1, kind: input, shape index: {}]
  %s2 = inlined_call_operand.hbm [shape: f32[32,32], index: 2, kind: input, shape index: {}]
  %s3 = inlined_call_operand.vmem [shape: f32[1,32], index: 3, kind: input, shape index: {}]
  %s4 = inlined_call_operand.hbm [shape: f32[32,128], index: 4, kind: input, shape index: {}]
  %s5 = inlined_call_operand.vmem [shape: f32[1,128], index: 5, kind: input, shape index: {}]
  %s6 = inlined_call_operand.hbm [shape: f32[8,128], index: 6, kind: output, shape index: {}]
  %s7 = sld [smem:[#allocation0]]
  $region42: #{tpu_custom_call.1} parent=0
    _
  %s9 = ssub.s32 1, %s7
  %s10 = scalar_select 0, %s9, %s7
  %s12 = sshll.u32 %s0, 4
  %s13 = int_to_ptr.hbm [resolvable:$true] %s12
  %15 = dma.hbm_to_smem %s13, 16, [#allocation3], [#allocation2]
  %17 = dma.done [#allocation2], 16
  %18 = sfence
  $region1: #{tpu_custom_call.1} parent=0
    #allocation4 [shape = 'u8[16384]{0}', space=vmem, size = 0x4000, scoped, tag = 'input window, operand 1, single buffered']
    #allocation5 [shape = 's32[1]{0}', space=sflag, size = 0x4, scoped, tag = 'scoped memory for tpu_custom_call.1']
    #allocation6 [shape = 's32[1]{0}', space=sflag, size = 0x4, scoped, tag = 'scoped memory for tpu_custom_call.1']
    #allocation7 [shape = 'u8[16384]{0}', space=vmem, size = 0x4000, scoped, tag = 'input window, operand 2, single buffered']
    #allocation8 [shape = 's32[1]{0}', space=sflag, size = 0x4, scoped, tag = 'scoped memory for tpu_custom_call.1']
    #allocation9 [shape = 'u8[16384]{0}', space=vmem, size = 0x4000, scoped, tag = 'input window, operand 4, single buffered']
    #allocation10 [shape = 'u8[4096]{0}', space=vmem, size = 0x1000, scoped, tag = 'output window, operand 0, single buffered']
    %19 = vsyncpa [#allocation5], 0
    %20 = vsyncpa [#allocation8], 0
    %21 = vsyncpa [#allocation6], 0
    // Predicated region
    $region2: #{tpu_custom_call.1} parent=1 // pred_check
      _
    $region3: #{tpu_custom_call.1} parent=1 // pred_check_branch
      %23 = sbr.rel (0) target = $region5
    $region4: #{tpu_custom_call.1} parent=1 // pred_region
      %25 = vsyncadd [#allocation5], 0
      %s26 = sshll.u32 %s1, 4
      %s27 = int_to_ptr.hbm [resolvable:$true] %s26
      %s28 = sshll.u32 [#allocation4], 4
      %s29 = int_to_ptr.vmem [resolvable:$true] %s28
      %34 = dma.hbm_to_vmem [thread:$0]  %s27, 512, %s29, [#allocation5], 128, 128, 8
    $region5: #{tpu_custom_call.1} parent=1 // pred_fallthru
      _
    // Predicated region
    $region6: #{tpu_custom_call.1} parent=1 // pred_check
      _
    $region7: #{tpu_custom_call.1} parent=1 // pred_check_branch
      %36 = sbr.rel (0) target = $region9
    $region8: #{tpu_custom_call.1} parent=1 // pred_region
      %38 = vsyncadd [#allocation8], 0
      %s39 = sshll.u32 %s2, 4
      %s40 = int_to_ptr.hbm [resolvable:$true] %s39
      %s41 = sshll.u32 [#allocation7], 4
      %s42 = int_to_ptr.vmem [resolvable:$true] %s41
      %47 = dma.hbm_to_vmem [thread:$0]  %s40, 512, %s42, [#allocation8], 128, 128, 8
    $region9: #{tpu_custom_call.1} parent=1 // pred_fallthru
      _
    // Predicated region
    $region10: #{tpu_custom_call.1} parent=1 // pred_check
      _
    $region11: #{tpu_custom_call.1} parent=1 // pred_check_branch
      %49 = sbr.rel (0) target = $region13
    $region12: #{tpu_custom_call.1} parent=1 // pred_region
      _
    $region13: #{tpu_custom_call.1} parent=1 // pred_fallthru
      _
    // Predicated region
    $region14: #{tpu_custom_call.1} parent=1 // pred_check
      _
    $region15: #{tpu_custom_call.1} parent=1 // pred_check_branch
      %51 = sbr.rel (0) target = $region17
    $region16: #{tpu_custom_call.1} parent=1 // pred_region
      %53 = vsyncadd [#allocation8], 0
      %s54 = sshll.u32 %s4, 4
      %s55 = int_to_ptr.hbm [resolvable:$true] %s54
      %s56 = sshll.u32 [#allocation9], 4
      %s57 = int_to_ptr.vmem [resolvable:$true] %s56
      %62 = dma.hbm_to_vmem [thread:$0]  %s55, 512, %s57, [#allocation8], 128, 128, 8
    $region17: #{tpu_custom_call.1} parent=1 // pred_fallthru
      _
    // Predicated region
    $region18: #{tpu_custom_call.1} parent=1 // pred_check
      _
    $region19: #{tpu_custom_call.1} parent=1 // pred_check_branch
      %64 = sbr.rel (0) target = $region21
    $region20: #{tpu_custom_call.1} parent=1 // pred_region
      _
    $region21: #{tpu_custom_call.1} parent=1 // pred_fallthru
      _
    // Predicated region
    $region22: #{tpu_custom_call.1} parent=1 // pred_check
      _
    $region23: #{tpu_custom_call.1} parent=1 // pred_check_branch
      %66 = sbr.rel (0) target = $region25
    $region24: #{tpu_custom_call.1} parent=1 // pred_region
      %68 = dma.done [#allocation5], 512
    $region25: #{tpu_custom_call.1} parent=1 // pred_fallthru
      _
    // Predicated region
    $region26: #{tpu_custom_call.1} parent=1 // pred_check
      _
    $region27: #{tpu_custom_call.1} parent=1 // pred_check_branch
      %70 = sbr.rel (0) target = $region29
    $region28: #{tpu_custom_call.1} parent=1 // pred_region
      %72 = dma.done [#allocation8], 512
    $region29: #{tpu_custom_call.1} parent=1 // pred_fallthru
      _
    // Predicated region
    $region30: #{tpu_custom_call.1} parent=1 // pred_check
      _
    $region31: #{tpu_custom_call.1} parent=1 // pred_check_branch
      %74 = sbr.rel (0) target = $region33
    $region32: #{tpu_custom_call.1} parent=1 // pred_region
      %76 = dma.done [#allocation8], 512
    $region33: #{tpu_custom_call.1} parent=1 // pred_fallthru
      _
    %s77 = sld [smem:[#allocation3]]
    %v78 = vld [vmem:[#allocation4] sm:$0xff]
    %v79 = vstv %s77
    %v80 = vmul.f32 %v79, %v78
    %s81 = sld [smem:[#allocation3 + $0x1]]
    %s82 = scalar_lea.vmem [#allocation4], 8
    %v83 = vld [vmem:[%s82] sm:$0xff]
    %v84 = vstv %s81
    %v85 = vmul.f32 %v84, %v83
    %v86 = vadd.f32 %v80, %v85
    %s87 = sld [smem:[#allocation3 + $0x2]]
    %s88 = scalar_lea.vmem [#allocation4], 16
    %v89 = vld [vmem:[%s88] sm:$0xff]
    %v90 = vstv %s87
    %v91 = vmul.f32 %v90, %v89
    %v92 = vadd.f32 %v86, %v91
    %s93 = sld [smem:[#allocation3 + $0x3]]
    %s94 = scalar_lea.vmem [#allocation4], 24
    %v95 = vld [vmem:[%s94] sm:$0xff]
    %v96 = vstv %s93
    %v97 = vmul.f32 %v96, %v95
    %v98 = vadd.f32 %v92, %v97
    %v99 = vld [vmem:[#allocation7] sm:$0xff]
    %v100 = vld [vmem:[#allocation7 + $0x8] sm:$0xff]
    %v101 = vld [vmem:[#allocation7 + $0x10] sm:$0xff]
    %v102 = vld [vmem:[#allocation7 + $0x18] sm:$0xff]
    %v103 = vld [vmem:[%s3] sm:$0x1]
    %v105 = vperm.slane %v103, 0
    %vm107 = vcmask 261120
    %v109 = vsel %vm107, %v98, 0
    %111 = vmatpush.msra.mxu0 0.0
    %112 = vmatpush.msra.mxu0 0.0
    %113 = vmatpush.msra.mxu0 0.0
    %114 = vmatpush.msra.mxu0 0.0
    %115 = vmatpush.msra.mxu0 0.0
    %116 = vmatpush.msra.mxu0 0.0
    %117 = vmatpush.msra.mxu0 0.0
    %118 = vmatpush.msra.mxu0 0.0
    %119 = vmatpush.msra.mxu0 0.0
    %120 = vmatpush.msra.mxu0 0.0
    %121 = vmatpush.msra.mxu0 0.0
    %122 = vmatpush.msra.mxu0 0.0
    %123 = vmatpush.msra.mxu0 %v102
    %124 = vmatpush.msra.mxu0 %v101
    %125 = vmatpush.msra.mxu0 %v100
    %126 = vmatpush.msra.mxu0 %v99
    %127 = vmatmul.f32.gmra.mxu0 %v109
    %v128 = vpop.f32.mrf.mxu0
    %v129 = vadd.f32 %v105, %v128
    %130 = vdwg.mxu0
    %v131 = vtanh.pop %v129
    %v132 = vld [vmem:[#allocation9] sm:$0xff]
    %v133 = vld [vmem:[#allocation9 + $0x8] sm:$0xff]
    %v134 = vld [vmem:[#allocation9 + $0x10] sm:$0xff]
    %v135 = vld [vmem:[#allocation9 + $0x18] sm:$0xff]
    %v136 = vld [vmem:[%s5] sm:$0x1]
    %v138 = vperm.slane %v136, 0
    %v141 = vsel %vm107, %v131, 0
    %143 = vmatpush.msra.mxu0 0.0
    %144 = vmatpush.msra.mxu0 0.0
    %145 = vmatpush.msra.mxu0 0.0
    %146 = vmatpush.msra.mxu0 0.0
    %147 = vmatpush.msra.mxu0 0.0
    %148 = vmatpush.msra.mxu0 0.0
    %149 = vmatpush.msra.mxu0 0.0
    %150 = vmatpush.msra.mxu0 0.0
    %151 = vmatpush.msra.mxu0 0.0
    %152 = vmatpush.msra.mxu0 0.0
    %153 = vmatpush.msra.mxu0 0.0
    %154 = vmatpush.msra.mxu0 0.0
    %155 = vmatpush.msra.mxu0 %v135
    %156 = vmatpush.msra.mxu0 %v134
    %157 = vmatpush.msra.mxu0 %v133
    %158 = vmatpush.msra.mxu0 %v132
    %159 = vmatmul.f32.gmra.mxu0 %v141
    %v160 = vpop.f32.mrf.mxu0
    %v161 = vadd.f32 %v138, %v160
    %162 = vdwg.mxu0
    %163 = vst [vmem:[#allocation10] sm:$0xff] %v161
    // Predicated region
    $region34: #{tpu_custom_call.1} parent=1 // pred_check
      _
    $region35: #{tpu_custom_call.1} parent=1 // pred_check_branch
      %165 = sbr.rel (0) target = $region37
    $region36: #{tpu_custom_call.1} parent=1 // pred_region
      %167 = vsyncadd [#allocation6], 0
      %s169 = sshll.u32 [#allocation10], 4
      %s170 = int_to_ptr.vmem [resolvable:$true] %s169
      %s171 = sshll.u32 %s6, 4
      %s172 = int_to_ptr.hbm [resolvable:$true] %s171
      %174 = dma.vmem_to_hbm [thread:$0]  %s170, 128, %s172, [#allocation6]
    $region37: #{tpu_custom_call.1} parent=1 // pred_fallthru
      _
    // Predicated region
    $region38: #{tpu_custom_call.1} parent=1 // pred_check
      _
    $region39: #{tpu_custom_call.1} parent=1 // pred_check_branch
      %176 = sbr.rel (0) target = $region41
    $region40: #{tpu_custom_call.1} parent=1 // pred_region
      %178 = dma.done [#allocation6], 128
    $region41: #{tpu_custom_call.1} parent=1 // pred_fallthru
      _
    %179 = vsyncpa [#allocation5], 1
    %180 = vsyncpa [#allocation8], 1
    %181 = vsyncpa [#allocation6], 1

</llo_original>
